<compile_context>
chip_gen: v7x
topology: tpu7x:2x2x1
jax: 0.10.0
libtpu: 0.0.40
codegen_flags: <defaults>
</compile_context>

<pallas_src>
import jax
import jax.numpy as jnp
from jax.experimental import pallas as pl
from jax.experimental.pallas import tpu as pltpu


def _round_up(x, m):
    return ((x + m - 1) // m) * m


def _pick_tm(n, want=512):
    """Row-tile heuristic: large tiles, small row padding, and >= 2 grid steps
    when there is enough work (so both v7x TensorCores get a share)."""
    n8 = _round_up(max(n, 1), 8)
    cap = _round_up((n8 + 1) // 2, 8) if n8 >= 16 else n8
    want = max(8, min(want, cap))
    tol = max(n8 // 8, 8)            # tolerate a few percent of row padding
    for c in (1024, 512, 256, 128, 64, 32, 16, 8):
        if c <= want and _round_up(n8, c) - n8 <= tol:
            return c
    return 8


# ---------------------------------------------------------------------------
# Fused dense head kernel (online softmax over 5 metapaths).
# ---------------------------------------------------------------------------
def _mag_head_kernel(x0_ref, x1_ref, x2_ref, x3_ref, x4_ref,
                     w_ref, b_ref, av_ref, wm_ref, bm_ref, o_ref):
    x_refs = (x0_ref, x1_ref, x2_ref, x3_ref, x4_ref)

    # metapath 0 initializes the running softmax stats
    h = jnp.dot(x_refs[0][...], w_ref[0],
                preferred_element_type=jnp.float32) + b_ref[0]
    h = jnp.maximum(h, 0.0)                                # relu(fc_0(.))
    m = jnp.sum(h * av_ref[0], axis=-1, keepdims=True)     # running max = s_0
    l = jnp.ones_like(m)                                   # exp(s_0 - m) == 1
    acc = h                                                # h_0 * exp(0)

    # metapaths 1..4: online softmax — only h, acc, m, l stay live
    for p in range(1, 5):
        h = jnp.dot(x_refs[p][...], w_ref[p],
                    preferred_element_type=jnp.float32) + b_ref[p]
        h = jnp.maximum(h, 0.0)
        s = jnp.sum(h * av_ref[p], axis=-1, keepdims=True)
        m_new = jnp.maximum(m, s)
        scale = jnp.exp(m - m_new)
        e = jnp.exp(s - m_new)
        l = l * scale + e
        acc = acc * scale + h * e
        m = m_new

    inv = pl.reciprocal(l, approx=True)                    # EUP slot, ~free
    h_final = jnp.maximum(acc * inv, 0.0)                  # relu (classify head)

    out = jnp.dot(h_final.astype(wm_ref.dtype), wm_ref[...],
                  preferred_element_type=jnp.float32) + bm_ref[...]
    o_ref[...] = out.astype(o_ref.dtype)


def mag_head(x_paths, fc_w, fc_b, att_vec, mlp_w, mlp_b, *, tm=512):
    """x_paths: list of 5 (N, D) metapath aggregates.
    fc_w: (5, D, D) pre-transposed weights; fc_b: (5, D); att_vec: (5, D);
    mlp_w: (D, C) pre-transposed; mlp_b: (C,).  Returns (N, C) float32."""
    n, d = x_paths[0].shape
    c = mlp_w.shape[1]
    tm = _pick_tm(n, tm)
    np_rows = _round_up(n, tm)

    def to_bf16_rows(a):
        a = a.astype(jnp.bfloat16)
        if np_rows != a.shape[0]:                  # pad rows only when needed
            a = jnp.pad(a, ((0, np_rows - a.shape[0]), (0, 0)))
        return a

    xs = [to_bf16_rows(x) for x in x_paths]
    w = fc_w.astype(jnp.bfloat16)                          # (5, D, D)
    b = fc_b.astype(jnp.float32).reshape(5, 1, d)          # (5, 1, D)
    av = att_vec.astype(jnp.float32).reshape(5, 1, d)      # (5, 1, D)
    wm = mlp_w.astype(jnp.bfloat16)                        # (D, C)
    bm = mlp_b.astype(jnp.float32).reshape(1, c)           # (1, C)

    x_spec = pl.BlockSpec((tm, d), lambda i: (i, 0))

    # VMEM budget: double-buffered bf16 x tiles + f32 out tile + resident
    # weights (double-buffered worst case), with headroom.  Cap at v7x's
    # 64 MiB physical VMEM.
    vmem_bytes = (2 * 5 * tm * d * 2 + 2 * tm * c * 4
                  + 2 * ((5 * d * d + d * c) * 2 + (10 * d + c) * 4))
    vmem_limit = int(min(max(4 * vmem_bytes, 16 << 20), 64 << 20))

    out = pl.pallas_call(
        _mag_head_kernel,
        out_shape=jax.ShapeDtypeStruct((np_rows, c), jnp.float32),
        grid_spec=pltpu.PrefetchScalarGridSpec(
            num_scalar_prefetch=0,
            grid=(np_rows // tm,),
            in_specs=[x_spec] * 5 + [
                pl.BlockSpec((5, d, d), lambda i: (0, 0, 0)),   # fc weights
                pl.BlockSpec((5, 1, d), lambda i: (0, 0, 0)),   # fc biases
                pl.BlockSpec((5, 1, d), lambda i: (0, 0, 0)),   # att_vec
                pl.BlockSpec((d, c), lambda i: (0, 0)),         # mlp weight
                pl.BlockSpec((1, c), lambda i: (0, 0)),         # mlp bias
            ],
            out_specs=pl.BlockSpec((tm, c), lambda i: (i, 0)),
        ),
        compiler_params=pltpu.CompilerParams(
            dimension_semantics=("parallel",),
            vmem_limit_bytes=vmem_limit),
    )(*xs, w, b, av, wm, bm)
    return out[:n] if np_rows != n else out


# ---------------------------------------------------------------------------
# Graph glue (plain JAX).
# TODO(synk): edge-indexed scatter_mean gather/scatter is data-dependent and
# stays in plain JAX; no clean static-BlockSpec Pallas mapping.
# ---------------------------------------------------------------------------
def _scatter_mean(src, index, dim_size):
    sums = jax.ops.segment_sum(src, index, num_segments=dim_size)
    cnt = jax.ops.segment_sum(jnp.ones((src.shape[0], 1), src.dtype),
                              index, num_segments=dim_size)
    return sums / jnp.maximum(cnt, 1.0)


def _metapath_aggregates(x_list, edge_index_list, edge_weight_list,
                         edge_index_12, edge_index_13):
    x_node = x_list[0]
    s1, s2, s3 = edge_index_list[1], edge_index_list[2], edge_index_list[3]

    if edge_weight_list[0] is None:
        edge_weight_list = [jnp.ones((ei.shape[1],), x_node.dtype)
                            for ei in edge_index_list]
    w1 = edge_weight_list[1][:, None]
    w2 = edge_weight_list[2][:, None]
    w3 = edge_weight_list[3][:, None]

    n0 = x_node.shape[0]
    n1, n2, n3 = x_list[1].shape[0], x_list[2].shape[0], x_list[3].shape[0]

    # --- metapath s1s ---
    msg_1 = _scatter_mean(x_node[s1[0]] * w1, s1[1], n1)
    net_msg1 = (msg_1 + x_list[1]) / 2
    s1s_raw = _scatter_mean(net_msg1[s1[1]], s1[0], n0)

    # --- metapath s2s ---
    msg_2 = _scatter_mean(x_node[s2[0]] * w2, s2[1], n2)
    net_msg2 = (msg_2 + x_list[2]) / 2
    s2s_raw = _scatter_mean(net_msg2[s2[1]], s2[0], n0)

    # --- metapath s3s ---
    msg_3 = _scatter_mean(x_node[s3[0]] * w3, s3[1], n3)
    net_msg3 = (msg_3 + x_list[3]) / 2
    s3s_raw = _scatter_mean(net_msg3[s3[1]], s3[0], n0)

    # --- metapath s121s (msg_1_s121s / net_msg1_s121s equal msg_1 / net_msg1) ---
    msg_2_121 = _scatter_mean(net_msg1[edge_index_12[0]], edge_index_12[1], n2)
    net_msg2_121 = (msg_2_121 + x_list[2]) / 2
    msg_3_121 = _scatter_mean(net_msg2_121[edge_index_12[1]], edge_index_12[0], n1)
    net_msg3_121 = (msg_3_121 + x_list[1]) / 2
    s121s_raw = _scatter_mean(net_msg3_121[s1[1]] * w1, s1[0], n0)

    # --- metapath s131s ---
    msg_2_131 = _scatter_mean(net_msg1[edge_index_13[0]], edge_index_13[1], n3)
    net_msg2_131 = (msg_2_131 + x_list[3]) / 2
    msg_3_131 = _scatter_mean(net_msg2_131[edge_index_13[1]], edge_index_13[0], n1)
    net_msg3_131 = (msg_3_131 + x_list[1]) / 2
    s131s_raw = _scatter_mean(net_msg3_131[s1[1]] * w1, s1[0], n0)

    return [s1s_raw, s2s_raw, s3s_raw, s121s_raw, s131s_raw]


def mag_classify_forward(params, x_list, edge_index_list, edge_weight_list,
                         edge_index_12, edge_index_13, *, tm=512):
    """Inference-mode forward of MAG_classify.
    TODO(synk): dropout layers are omitted (identity in eval mode)."""
    raws = _metapath_aggregates(x_list, edge_index_list, edge_weight_list,
                                edge_index_12, edge_index_13)
    return mag_head(raws, params["fc_w"], params["fc_b"], params["att_vec"],
                    params["mlp_w"], params["mlp_b"], tm=tm)


if __name__ == "__main__":
    key = jax.random.PRNGKey(0)
    ks = jax.random.split(key, 20)

    embed_dim, nclass = 32, 8
    n0, n1, n2, n3 = 16, 12, 10, 8            # node counts per node type
    e0, e1, e2, e3 = 10, 40, 30, 24           # edge counts
    e12, e13 = 20, 18

    x_list = [
        jax.random.normal(ks[0], (n0, embed_dim), jnp.float32),
        jax.random.normal(ks[1], (n1, embed_dim), jnp.float32),
        jax.random.normal(ks[2], (n2, embed_dim), jnp.float32),
        jax.random.normal(ks[3], (n3, embed_dim), jnp.float32),
    ]

    def rand_edges(k, e, src_n, dst_n):
        ka, kb = jax.random.split(k)
        return jnp.stack([
            jax.random.randint(ka, (e,), 0, src_n),
            jax.random.randint(kb, (e,), 0, dst_n),
        ])

    edge_index_list = [
        rand_edges(ks[4], e0, n0, n0),        # index 0 (unused when weights given)
        rand_edges(ks[5], e1, n0, n1),        # s -> type1
        rand_edges(ks[6], e2, n0, n2),        # s -> type2
        rand_edges(ks[7], e3, n0, n3),        # s -> type3
    ]
    edge_index_12 = rand_edges(ks[8], e12, n1, n2)
    edge_index_13 = rand_edges(ks[9], e13, n1, n3)

    edge_weight_list = [
        jax.random.uniform(ks[10], (e0,), jnp.float32, 0.5, 1.5),
        jax.random.uniform(ks[11], (e1,), jnp.float32, 0.5, 1.5),
        jax.random.uniform(ks[12], (e2,), jnp.float32, 0.5, 1.5),
        jax.random.uniform(ks[13], (e3,), jnp.float32, 0.5, 1.5),
    ]

    bound = 1.0 / (embed_dim ** 0.5)
    params = {
        # five per-metapath Linear(D, D) weights, pre-transposed to (in, out)
        "fc_w": jax.random.uniform(ks[14], (5, embed_dim, embed_dim),
                                   jnp.float32, -bound, bound),
        "fc_b": jax.random.uniform(ks[15], (5, embed_dim),
                                   jnp.float32, -bound, bound),
        "att_vec": jax.random.normal(ks[16], (5, embed_dim), jnp.float32) * 0.3,
        # classifier Linear(D, nclass), pre-transposed, std=0.05 init
        "mlp_w": jax.random.normal(ks[17], (embed_dim, nclass),
                                   jnp.float32) * 0.05,
        "mlp_b": jax.random.uniform(ks[18], (nclass,),
                                    jnp.float32, -bound, bound),
    }

    out = mag_classify_forward(params, x_list, edge_index_list,
                               edge_weight_list, edge_index_12, edge_index_13)
    out = jax.block_until_ready(out)

    # ---- pure-JAX f32 reference for the fused head (glue is shared) ----
    raws = _metapath_aggregates(x_list, edge_index_list, edge_weight_list,
                                edge_index_12, edge_index_13)
    hs = [jnp.maximum(raws[p] @ params["fc_w"][p] + params["fc_b"][p], 0.0)
          for p in range(5)]
    all_mp = jnp.stack(hs, axis=1)                                   # (N, 5, D)
    scores = jnp.sum(all_mp * params["att_vec"][None], axis=2)       # (N, 5)
    wts = jax.nn.softmax(scores, axis=1)[..., None]
    h_final = jnp.maximum(jnp.sum(all_mp * wts, axis=1), 0.0)
    ref = h_final @ params["mlp_w"] + params["mlp_b"]

    assert out.shape == (n0, nclass)
    # bf16 matmuls + approx reciprocal -> loosened tolerance vs f32 reference.
    assert jnp.allclose(out, ref, atol=5e-2, rtol=5e-2), (
        float(jnp.max(jnp.abs(out - ref))))

    print("KERNEL_OK")
</pallas_src>

<mosaic_0001>
module attributes {stable_mosaic.version = 11 : i64} {
  func.func @_mag_head_kernel(%arg0: i32, %arg1: memref<8x32xbf16, #tpu.memory_space<vmem>>, %arg2: memref<8x32xbf16, #tpu.memory_space<vmem>>, %arg3: memref<8x32xbf16, #tpu.memory_space<vmem>>, %arg4: memref<8x32xbf16, #tpu.memory_space<vmem>>, %arg5: memref<8x32xbf16, #tpu.memory_space<vmem>>, %arg6: memref<5x32x32xbf16, #tpu.memory_space<vmem>>, %arg7: memref<5x1x32xf32, #tpu.memory_space<vmem>>, %arg8: memref<5x1x32xf32, #tpu.memory_space<vmem>>, %arg9: memref<32x8xbf16, #tpu.memory_space<vmem>>, %arg10: memref<1x8xf32, #tpu.memory_space<vmem>>, %arg11: memref<8x8xf32, #tpu.memory_space<vmem>>) attributes {dimension_semantics = [#tpu.dimension_semantics<parallel>], iteration_bounds = array<i64: 2>, scalar_prefetch = 0 : i64, scratch_operands = 0 : i64, tpu.core_type = #tpu.core_type<tc>, window_params = [{transform_indices = @transform_0, window_bounds = array<i64: 8, 32>}, {transform_indices = @transform_1, window_bounds = array<i64: 8, 32>}, {transform_indices = @transform_2, window_bounds = array<i64: 8, 32>}, {transform_indices = @transform_3, window_bounds = array<i64: 8, 32>}, {transform_indices = @transform_4, window_bounds = array<i64: 8, 32>}, {pipeline_mode = #tpu.pipeline_mode<synchronous>, transform_indices = @transform_5, window_bounds = array<i64: 5, 32, 32>}, {pipeline_mode = #tpu.pipeline_mode<synchronous>, transform_indices = @transform_6, window_bounds = array<i64: 5, 1, 32>}, {pipeline_mode = #tpu.pipeline_mode<synchronous>, transform_indices = @transform_7, window_bounds = array<i64: 5, 1, 32>}, {pipeline_mode = #tpu.pipeline_mode<synchronous>, transform_indices = @transform_8, window_bounds = array<i64: 32, 8>}, {pipeline_mode = #tpu.pipeline_mode<synchronous>, transform_indices = @transform_9, window_bounds = array<i64: 1, 8>}, {transform_indices = @transform_10, window_bounds = array<i64: 8, 8>}]} {
    %c0 = arith.constant 0 : index
    %c0_0 = arith.constant 0 : index
    %0 = vector.load %arg1[%c0, %c0_0] : memref<8x32xbf16, #tpu.memory_space<vmem>>, vector<8x32xbf16>
    %c0_1 = arith.constant 0 : index
    %c0_2 = arith.constant 0 : index
    %c0_3 = arith.constant 0 : index
    %1 = vector.load %arg6[%c0_1, %c0_2, %c0_3] : memref<5x32x32xbf16, #tpu.memory_space<vmem>>, vector<1x32x32xbf16>
    %2 = vector.shape_cast %1 : vector<1x32x32xbf16> to vector<32x32xbf16>
    %cst = arith.constant dense<0.000000e+00> : vector<8x32xf32>
    %3 = tpu.matmul %0, %2, %cst {dimension_numbers = #tpu.dot_dimension_numbers<[1], [0], [0], [1], [0, 0, 1, 1], [], []>} : vector<8x32xbf16>, vector<32x32xbf16>, vector<8x32xf32> -> vector<8x32xf32>
    %c0_4 = arith.constant 0 : index
    %c0_5 = arith.constant 0 : index
    %c0_6 = arith.constant 0 : index
    %4 = vector.load %arg7[%c0_4, %c0_5, %c0_6] : memref<5x1x32xf32, #tpu.memory_space<vmem>>, vector<1x1x32xf32>
    %5 = vector.shape_cast %4 : vector<1x1x32xf32> to vector<1x32xf32>
    %6 = vector.broadcast %5 : vector<1x32xf32> to vector<8x32xf32>
    %7 = arith.addf %3, %6 : vector<8x32xf32>
    %cst_7 = arith.constant 0.000000e+00 : f32
    %8 = vector.broadcast %cst_7 : f32 to vector<8x32xf32>
    %9 = arith.maximumf %7, %8 : vector<8x32xf32>
    %c0_8 = arith.constant 0 : index
    %c0_9 = arith.constant 0 : index
    %c0_10 = arith.constant 0 : index
    %10 = vector.load %arg8[%c0_8, %c0_9, %c0_10] : memref<5x1x32xf32, #tpu.memory_space<vmem>>, vector<1x1x32xf32>
    %11 = vector.shape_cast %10 : vector<1x1x32xf32> to vector<1x32xf32>
    %12 = vector.broadcast %11 : vector<1x32xf32> to vector<8x32xf32>
    %13 = arith.mulf %9, %12 : vector<8x32xf32>
    %cst_11 = arith.constant dense<0.000000e+00> : vector<8xf32>
    %14 = vector.multi_reduction <add>, %13, %cst_11 [1] : vector<8x32xf32> to vector<8xf32>
    %15 = vector.shape_cast %14 : vector<8xf32> to vector<8x1xf32>
    %cst_12 = arith.constant 1.000000e+00 : f32
    %16 = vector.broadcast %cst_12 : f32 to vector<8x1xf32>
    %c0_13 = arith.constant 0 : index
    %c0_14 = arith.constant 0 : index
    %17 = vector.load %arg2[%c0_13, %c0_14] : memref<8x32xbf16, #tpu.memory_space<vmem>>, vector<8x32xbf16>
    %c1 = arith.constant 1 : index
    %c0_15 = arith.constant 0 : index
    %c0_16 = arith.constant 0 : index
    %18 = vector.load %arg6[%c1, %c0_15, %c0_16] : memref<5x32x32xbf16, #tpu.memory_space<vmem>>, vector<1x32x32xbf16>
    %19 = vector.shape_cast %18 : vector<1x32x32xbf16> to vector<32x32xbf16>
    %cst_17 = arith.constant dense<0.000000e+00> : vector<8x32xf32>
    %20 = tpu.matmul %17, %19, %cst_17 {dimension_numbers = #tpu.dot_dimension_numbers<[1], [0], [0], [1], [0, 0, 1, 1], [], []>} : vector<8x32xbf16>, vector<32x32xbf16>, vector<8x32xf32> -> vector<8x32xf32>
    %c1_18 = arith.constant 1 : index
    %c0_19 = arith.constant 0 : index
    %c0_20 = arith.constant 0 : index
    %21 = vector.load %arg7[%c1_18, %c0_19, %c0_20] : memref<5x1x32xf32, #tpu.memory_space<vmem>>, vector<1x1x32xf32>
    %22 = vector.shape_cast %21 : vector<1x1x32xf32> to vector<1x32xf32>
    %23 = vector.broadcast %22 : vector<1x32xf32> to vector<8x32xf32>
    %24 = arith.addf %20, %23 : vector<8x32xf32>
    %cst_21 = arith.constant 0.000000e+00 : f32
    %25 = vector.broadcast %cst_21 : f32 to vector<8x32xf32>
    %26 = arith.maximumf %24, %25 : vector<8x32xf32>
    %c1_22 = arith.constant 1 : index
    %c0_23 = arith.constant 0 : index
    %c0_24 = arith.constant 0 : index
    %27 = vector.load %arg8[%c1_22, %c0_23, %c0_24] : memref<5x1x32xf32, #tpu.memory_space<vmem>>, vector<1x1x32xf32>
    %28 = vector.shape_cast %27 : vector<1x1x32xf32> to vector<1x32xf32>
    %29 = vector.broadcast %28 : vector<1x32xf32> to vector<8x32xf32>
    %30 = arith.mulf %26, %29 : vector<8x32xf32>
    %cst_25 = arith.constant dense<0.000000e+00> : vector<8xf32>
    %31 = vector.multi_reduction <add>, %30, %cst_25 [1] : vector<8x32xf32> to vector<8xf32>
    %32 = vector.shape_cast %31 : vector<8xf32> to vector<8x1xf32>
    %33 = arith.maximumf %15, %32 : vector<8x1xf32>
    %34 = arith.subf %15, %33 : vector<8x1xf32>
    %35 = math.exp %34 : vector<8x1xf32>
    %36 = arith.subf %32, %33 : vector<8x1xf32>
    %37 = math.exp %36 : vector<8x1xf32>
    %38 = arith.mulf %16, %35 : vector<8x1xf32>
    %39 = arith.addf %38, %37 : vector<8x1xf32>
    %40 = vector.broadcast %35 : vector<8x1xf32> to vector<8x32xf32>
    %41 = arith.mulf %9, %40 : vector<8x32xf32>
    %42 = vector.broadcast %37 : vector<8x1xf32> to vector<8x32xf32>
    %43 = arith.mulf %26, %42 : vector<8x32xf32>
    %44 = arith.addf %41, %43 : vector<8x32xf32>
    %c0_26 = arith.constant 0 : index
    %c0_27 = arith.constant 0 : index
    %45 = vector.load %arg3[%c0_26, %c0_27] : memref<8x32xbf16, #tpu.memory_space<vmem>>, vector<8x32xbf16>
    %c2 = arith.constant 2 : index
    %c0_28 = arith.constant 0 : index
    %c0_29 = arith.constant 0 : index
    %46 = vector.load %arg6[%c2, %c0_28, %c0_29] : memref<5x32x32xbf16, #tpu.memory_space<vmem>>, vector<1x32x32xbf16>
    %47 = vector.shape_cast %46 : vector<1x32x32xbf16> to vector<32x32xbf16>
    %cst_30 = arith.constant dense<0.000000e+00> : vector<8x32xf32>
    %48 = tpu.matmul %45, %47, %cst_30 {dimension_numbers = #tpu.dot_dimension_numbers<[1], [0], [0], [1], [0, 0, 1, 1], [], []>} : vector<8x32xbf16>, vector<32x32xbf16>, vector<8x32xf32> -> vector<8x32xf32>
    %c2_31 = arith.constant 2 : index
    %c0_32 = arith.constant 0 : index
    %c0_33 = arith.constant 0 : index
    %49 = vector.load %arg7[%c2_31, %c0_32, %c0_33] : memref<5x1x32xf32, #tpu.memory_space<vmem>>, vector<1x1x32xf32>
    %50 = vector.shape_cast %49 : vector<1x1x32xf32> to vector<1x32xf32>
    %51 = vector.broadcast %50 : vector<1x32xf32> to vector<8x32xf32>
    %52 = arith.addf %48, %51 : vector<8x32xf32>
    %cst_34 = arith.constant 0.000000e+00 : f32
    %53 = vector.broadcast %cst_34 : f32 to vector<8x32xf32>
    %54 = arith.maximumf %52, %53 : vector<8x32xf32>
    %c2_35 = arith.constant 2 : index
    %c0_36 = arith.constant 0 : index
    %c0_37 = arith.constant 0 : index
    %55 = vector.load %arg8[%c2_35, %c0_36, %c0_37] : memref<5x1x32xf32, #tpu.memory_space<vmem>>, vector<1x1x32xf32>
    %56 = vector.shape_cast %55 : vector<1x1x32xf32> to vector<1x32xf32>
    %57 = vector.broadcast %56 : vector<1x32xf32> to vector<8x32xf32>
    %58 = arith.mulf %54, %57 : vector<8x32xf32>
    %cst_38 = arith.constant dense<0.000000e+00> : vector<8xf32>
    %59 = vector.multi_reduction <add>, %58, %cst_38 [1] : vector<8x32xf32> to vector<8xf32>
    %60 = vector.shape_cast %59 : vector<8xf32> to vector<8x1xf32>
    %61 = arith.maximumf %33, %60 : vector<8x1xf32>
    %62 = arith.subf %33, %61 : vector<8x1xf32>
    %63 = math.exp %62 : vector<8x1xf32>
    %64 = arith.subf %60, %61 : vector<8x1xf32>
    %65 = math.exp %64 : vector<8x1xf32>
    %66 = arith.mulf %39, %63 : vector<8x1xf32>
    %67 = arith.addf %66, %65 : vector<8x1xf32>
    %68 = vector.broadcast %63 : vector<8x1xf32> to vector<8x32xf32>
    %69 = arith.mulf %44, %68 : vector<8x32xf32>
    %70 = vector.broadcast %65 : vector<8x1xf32> to vector<8x32xf32>
    %71 = arith.mulf %54, %70 : vector<8x32xf32>
    %72 = arith.addf %69, %71 : vector<8x32xf32>
    %c0_39 = arith.constant 0 : index
    %c0_40 = arith.constant 0 : index
    %73 = vector.load %arg4[%c0_39, %c0_40] : memref<8x32xbf16, #tpu.memory_space<vmem>>, vector<8x32xbf16>
    %c3 = arith.constant 3 : index
    %c0_41 = arith.constant 0 : index
    %c0_42 = arith.constant 0 : index
    %74 = vector.load %arg6[%c3, %c0_41, %c0_42] : memref<5x32x32xbf16, #tpu.memory_space<vmem>>, vector<1x32x32xbf16>
    %75 = vector.shape_cast %74 : vector<1x32x32xbf16> to vector<32x32xbf16>
    %cst_43 = arith.constant dense<0.000000e+00> : vector<8x32xf32>
    %76 = tpu.matmul %73, %75, %cst_43 {dimension_numbers = #tpu.dot_dimension_numbers<[1], [0], [0], [1], [0, 0, 1, 1], [], []>} : vector<8x32xbf16>, vector<32x32xbf16>, vector<8x32xf32> -> vector<8x32xf32>
    %c3_44 = arith.constant 3 : index
    %c0_45 = arith.constant 0 : index
    %c0_46 = arith.constant 0 : index
    %77 = vector.load %arg7[%c3_44, %c0_45, %c0_46] : memref<5x1x32xf32, #tpu.memory_space<vmem>>, vector<1x1x32xf32>
    %78 = vector.shape_cast %77 : vector<1x1x32xf32> to vector<1x32xf32>
    %79 = vector.broadcast %78 : vector<1x32xf32> to vector<8x32xf32>
    %80 = arith.addf %76, %79 : vector<8x32xf32>
    %cst_47 = arith.constant 0.000000e+00 : f32
    %81 = vector.broadcast %cst_47 : f32 to vector<8x32xf32>
    %82 = arith.maximumf %80, %81 : vector<8x32xf32>
    %c3_48 = arith.constant 3 : index
    %c0_49 = arith.constant 0 : index
    %c0_50 = arith.constant 0 : index
    %83 = vector.load %arg8[%c3_48, %c0_49, %c0_50] : memref<5x1x32xf32, #tpu.memory_space<vmem>>, vector<1x1x32xf32>
    %84 = vector.shape_cast %83 : vector<1x1x32xf32> to vector<1x32xf32>
    %85 = vector.broadcast %84 : vector<1x32xf32> to vector<8x32xf32>
    %86 = arith.mulf %82, %85 : vector<8x32xf32>
    %cst_51 = arith.constant dense<0.000000e+00> : vector<8xf32>
    %87 = vector.multi_reduction <add>, %86, %cst_51 [1] : vector<8x32xf32> to vector<8xf32>
    %88 = vector.shape_cast %87 : vector<8xf32> to vector<8x1xf32>
    %89 = arith.maximumf %61, %88 : vector<8x1xf32>
    %90 = arith.subf %61, %89 : vector<8x1xf32>
    %91 = math.exp %90 : vector<8x1xf32>
    %92 = arith.subf %88, %89 : vector<8x1xf32>
    %93 = math.exp %92 : vector<8x1xf32>
    %94 = arith.mulf %67, %91 : vector<8x1xf32>
    %95 = arith.addf %94, %93 : vector<8x1xf32>
    %96 = vector.broadcast %91 : vector<8x1xf32> to vector<8x32xf32>
    %97 = arith.mulf %72, %96 : vector<8x32xf32>
    %98 = vector.broadcast %93 : vector<8x1xf32> to vector<8x32xf32>
    %99 = arith.mulf %82, %98 : vector<8x32xf32>
    %100 = arith.addf %97, %99 : vector<8x32xf32>
    %c0_52 = arith.constant 0 : index
    %c0_53 = arith.constant 0 : index
    %101 = vector.load %arg5[%c0_52, %c0_53] : memref<8x32xbf16, #tpu.memory_space<vmem>>, vector<8x32xbf16>
    %c4 = arith.constant 4 : index
    %c0_54 = arith.constant 0 : index
    %c0_55 = arith.constant 0 : index
    %102 = vector.load %arg6[%c4, %c0_54, %c0_55] : memref<5x32x32xbf16, #tpu.memory_space<vmem>>, vector<1x32x32xbf16>
    %103 = vector.shape_cast %102 : vector<1x32x32xbf16> to vector<32x32xbf16>
    %cst_56 = arith.constant dense<0.000000e+00> : vector<8x32xf32>
    %104 = tpu.matmul %101, %103, %cst_56 {dimension_numbers = #tpu.dot_dimension_numbers<[1], [0], [0], [1], [0, 0, 1, 1], [], []>} : vector<8x32xbf16>, vector<32x32xbf16>, vector<8x32xf32> -> vector<8x32xf32>
    %c4_57 = arith.constant 4 : index
    %c0_58 = arith.constant 0 : index
    %c0_59 = arith.constant 0 : index
    %105 = vector.load %arg7[%c4_57, %c0_58, %c0_59] : memref<5x1x32xf32, #tpu.memory_space<vmem>>, vector<1x1x32xf32>
    %106 = vector.shape_cast %105 : vector<1x1x32xf32> to vector<1x32xf32>
    %107 = vector.broadcast %106 : vector<1x32xf32> to vector<8x32xf32>
    %108 = arith.addf %104, %107 : vector<8x32xf32>
    %cst_60 = arith.constant 0.000000e+00 : f32
    %109 = vector.broadcast %cst_60 : f32 to vector<8x32xf32>
    %110 = arith.maximumf %108, %109 : vector<8x32xf32>
    %c4_61 = arith.constant 4 : index
    %c0_62 = arith.constant 0 : index
    %c0_63 = arith.constant 0 : index
    %111 = vector.load %arg8[%c4_61, %c0_62, %c0_63] : memref<5x1x32xf32, #tpu.memory_space<vmem>>, vector<1x1x32xf32>
    %112 = vector.shape_cast %111 : vector<1x1x32xf32> to vector<1x32xf32>
    %113 = vector.broadcast %112 : vector<1x32xf32> to vector<8x32xf32>
    %114 = arith.mulf %110, %113 : vector<8x32xf32>
    %cst_64 = arith.constant dense<0.000000e+00> : vector<8xf32>
    %115 = vector.multi_reduction <add>, %114, %cst_64 [1] : vector<8x32xf32> to vector<8xf32>
    %116 = vector.shape_cast %115 : vector<8xf32> to vector<8x1xf32>
    %117 = arith.maximumf %89, %116 : vector<8x1xf32>
    %118 = arith.subf %89, %117 : vector<8x1xf32>
    %119 = math.exp %118 : vector<8x1xf32>
    %120 = arith.subf %116, %117 : vector<8x1xf32>
    %121 = math.exp %120 : vector<8x1xf32>
    %122 = arith.mulf %95, %119 : vector<8x1xf32>
    %123 = arith.addf %122, %121 : vector<8x1xf32>
    %124 = vector.broadcast %119 : vector<8x1xf32> to vector<8x32xf32>
    %125 = arith.mulf %100, %124 : vector<8x32xf32>
    %126 = vector.broadcast %121 : vector<8x1xf32> to vector<8x32xf32>
    %127 = arith.mulf %110, %126 : vector<8x32xf32>
    %128 = arith.addf %125, %127 : vector<8x32xf32>
    %129 = tpu.reciprocal %123 {approx = true} : vector<8x1xf32> -> vector<8x1xf32>
    %130 = vector.broadcast %129 : vector<8x1xf32> to vector<8x32xf32>
    %131 = arith.mulf %128, %130 : vector<8x32xf32>
    %cst_65 = arith.constant 0.000000e+00 : f32
    %132 = vector.broadcast %cst_65 : f32 to vector<8x32xf32>
    %133 = arith.maximumf %131, %132 : vector<8x32xf32>
    %134 = arith.truncf %133 : vector<8x32xf32> to vector<8x32xbf16>
    %c0_66 = arith.constant 0 : index
    %c0_67 = arith.constant 0 : index
    %135 = vector.load %arg9[%c0_66, %c0_67] : memref<32x8xbf16, #tpu.memory_space<vmem>>, vector<32x8xbf16>
    %cst_68 = arith.constant dense<0.000000e+00> : vector<8x8xf32>
    %136 = tpu.matmul %134, %135, %cst_68 {dimension_numbers = #tpu.dot_dimension_numbers<[1], [0], [0], [1], [0, 0, 1, 1], [], []>} : vector<8x32xbf16>, vector<32x8xbf16>, vector<8x8xf32> -> vector<8x8xf32>
    %c0_69 = arith.constant 0 : index
    %c0_70 = arith.constant 0 : index
    %137 = vector.load %arg10[%c0_69, %c0_70] : memref<1x8xf32, #tpu.memory_space<vmem>>, vector<1x8xf32>
    %138 = vector.broadcast %137 : vector<1x8xf32> to vector<8x8xf32>
    %139 = arith.addf %136, %138 : vector<8x8xf32>
    %c0_71 = arith.constant 0 : index
    %c0_72 = arith.constant 0 : index
    %140 = vector.load %arg11[%c0_71, %c0_72] : memref<8x8xf32, #tpu.memory_space<vmem>>, vector<8x8xf32>
    tpu.vector_store %arg11[%c0_71, %c0_72], %139 {strides = array<i32>} : memref<8x8xf32, #tpu.memory_space<vmem>>, vector<8x8xf32>,
    return
  }
  func.func @transform_0(%arg0: i32) -> (i32, i32) {
    %c0_i32 = arith.constant 0 : i32
    %c0_i32_0 = arith.constant 0 : i32
    return %arg0, %c0_i32 : i32, i32
  }
  func.func @transform_1(%arg0: i32) -> (i32, i32) {
    %c0_i32 = arith.constant 0 : i32
    %c0_i32_0 = arith.constant 0 : i32
    return %arg0, %c0_i32 : i32, i32
  }
  func.func @transform_2(%arg0: i32) -> (i32, i32) {
    %c0_i32 = arith.constant 0 : i32
    %c0_i32_0 = arith.constant 0 : i32
    return %arg0, %c0_i32 : i32, i32
  }
  func.func @transform_3(%arg0: i32) -> (i32, i32) {
    %c0_i32 = arith.constant 0 : i32
    %c0_i32_0 = arith.constant 0 : i32
    return %arg0, %c0_i32 : i32, i32
  }
  func.func @transform_4(%arg0: i32) -> (i32, i32) {
    %c0_i32 = arith.constant 0 : i32
    %c0_i32_0 = arith.constant 0 : i32
    return %arg0, %c0_i32 : i32, i32
  }
  func.func @transform_5(%arg0: i32) -> (i32, i32, i32) {
    %c0_i32 = arith.constant 0 : i32
    %c0_i32_0 = arith.constant 0 : i32
    %c0_i32_1 = arith.constant 0 : i32
    %c0_i32_2 = arith.constant 0 : i32
    return %c0_i32, %c0_i32_0, %c0_i32_1 : i32, i32, i32
  }
  func.func @transform_6(%arg0: i32) -> (i32, i32, i32) {
    %c0_i32 = arith.constant 0 : i32
    %c0_i32_0 = arith.constant 0 : i32
    %c0_i32_1 = arith.constant 0 : i32
    %c0_i32_2 = arith.constant 0 : i32
    return %c0_i32, %c0_i32_0, %c0_i32_1 : i32, i32, i32
  }
  func.func @transform_7(%arg0: i32) -> (i32, i32, i32) {
    %c0_i32 = arith.constant 0 : i32
    %c0_i32_0 = arith.constant 0 : i32
    %c0_i32_1 = arith.constant 0 : i32
    %c0_i32_2 = arith.constant 0 : i32
    return %c0_i32, %c0_i32_0, %c0_i32_1 : i32, i32, i32
  }
  func.func @transform_8(%arg0: i32) -> (i32, i32) {
    %c0_i32 = arith.constant 0 : i32
    %c0_i32_0 = arith.constant 0 : i32
    %c0_i32_1 = arith.constant 0 : i32
    return %c0_i32, %c0_i32_0 : i32, i32
  }
  func.func @transform_9(%arg0: i32) -> (i32, i32) {
    %c0_i32 = arith.constant 0 : i32
    %c0_i32_0 = arith.constant 0 : i32
    %c0_i32_1 = arith.constant 0 : i32
    return %c0_i32, %c0_i32_0 : i32, i32
  }
  func.func @transform_10(%arg0: i32) -> (i32, i32) {
    %c0_i32 = arith.constant 0 : i32
    %c0_i32_0 = arith.constant 0 : i32
    return %arg0, %c0_i32 : i32, i32
  }
}

</mosaic_0001>

<llo_original>
// kernel: tpu_custom_call.1
$region0: #{tpu_custom_call.1}
  #allocation0 [shape = 'u32[]', space=smem, size = 0x4, offset = 0x4, fixed_abs, tag = 'smem constant byte address 0x4 - core index']
  #allocation1 [shape = 'u32[144,128]{1,0:T(1,128)}', space=vmem, size = 0x12000, scoped, tag = 'internal scratch']
  %s0 = inlined_call_operand.vmem [shape: bf16[16,32], index: 0, kind: input, shape index: {}]
  %s1 = inlined_call_operand.vmem [shape: bf16[16,32], index: 1, kind: input, shape index: {}]
  %s2 = inlined_call_operand.vmem [shape: bf16[16,32], index: 2, kind: input, shape index: {}]
  %s3 = inlined_call_operand.hbm [shape: bf16[16,32], index: 3, kind: input, shape index: {}]
  %s4 = inlined_call_operand.vmem [shape: bf16[16,32], index: 4, kind: input, shape index: {}]
  %s5 = inlined_call_operand.hbm [shape: bf16[5,32,32], index: 5, kind: input, shape index: {}]
  %s6 = inlined_call_operand.vmem [shape: f32[5,1,32], index: 6, kind: input, shape index: {}]
  %s7 = inlined_call_operand.vmem [shape: f32[5,1,32], index: 7, kind: input, shape index: {}]
  %s8 = inlined_call_operand.vmem [shape: bf16[32,8], index: 8, kind: input, shape index: {}]
  %s9 = inlined_call_operand.vmem [shape: f32[1,8], index: 9, kind: input, shape index: {}]
  %s10 = inlined_call_operand.vmem [shape: f32[16,8], index: 10, kind: output, shape index: {}]
  %s11 = sld [smem:[#allocation0]]
  $region81: #{tpu_custom_call.1} parent=0
    _
  %s13 = ssub.s32 1, %s11
  %s14 = scalar_select 0, %s13, %s11
  $region1: #{tpu_custom_call.1} parent=0
    #allocation2 [shape = 'u8[4096]{0}', space=vmem, size = 0x1000, scoped, tag = 'input window, operand 3']
    #allocation3 [shape = 's32[2]{0}', space=sflag, size = 0x8, scoped, tag = 'scoped memory for tpu_custom_call.1']
    #allocation4 [shape = 'u8[40960]{0}', space=vmem, size = 0xa000, scoped, tag = 'input window, operand 5, single buffered']
    #allocation5 [shape = 's32[1]{0}', space=sflag, size = 0x4, scoped, tag = 'scoped memory for tpu_custom_call.1']
    %15 = vsyncpa [#allocation3], 0
    %s16 = scalar_lea.sflag [#allocation3], 1
    %17 = vsyncpa %s16, 0
    %18 = vsyncpa [#allocation5], 0
    loop: start=0, step=1, limit=4
    $region2: #{tpu_custom_call.1} parent=1 // loop_pre_header
      _
    $region3: #{tpu_custom_call.1} parent=1 // loop_header
      %s20 = sphi 0, %s24
      %p21 = scmp.ge.s32.totalorder %s20, 4
      %s30 = sphi 0, %s32
      %s33 = sphi 0, %s30
      %s34 = sphi 0, %s33
      %s50 = sphi 0, %s34
      %s56 = sphi 0, %s58
      %s59 = sphi 0, %s56
      %s60 = sphi 0, %s59
      %s76 = sphi 0, %s60
      %s82 = sphi 0, %s84
      %s85 = sphi 0, %s82
      %s86 = sphi 0, %s85
      %s102 = sphi 0, %s86
      %s108 = sphi 0, %s110
      %s111 = sphi 0, %s108
      %s112 = sphi 0, %s111
      %s128 = sphi 0, %s112
      %s134 = sphi 0, %s136
      %s137 = sphi 0, %s134
      %s138 = sphi 0, %s137
      %s154 = sphi 0, %s138
      %s158 = sphi 0, %s158
      %s160 = sphi 0, %s158
      %s161 = sphi 0, %s160
      %s175 = sphi 0, %s161
      %s179 = sphi 0, %s179
      %s181 = sphi 0, %s179
      %s182 = sphi 0, %s181
      %s196 = sphi 0, %s182
      %s200 = sphi 0, %s200
      %s202 = sphi 0, %s200
      %s203 = sphi 0, %s202
      %s217 = sphi 0, %s203
      %s221 = sphi 0, %s221
      %s223 = sphi 0, %s221
      %s224 = sphi 0, %s223
      %s238 = sphi 0, %s224
      %s242 = sphi 0, %s242
      %s244 = sphi 0, %s242
      %s245 = sphi 0, %s244
      %s259 = sphi 0, %s245
      %s265 = sphi 0, %s267
      %s268 = sphi 0, %s265
      %s269 = sphi 0, %s268
      %s285 = sphi 0, %s269
    $region4: #{tpu_custom_call.1} parent=1 // loop_header_branch
      %23 = sbr.rel (%p21) target = $region8
    $region5: #{tpu_custom_call.1} parent=1 // loop_body
      %s25 = ssub.s32 %s20, 1
      %s26 = ssub.s32 %s20, 2
      %s27 = sadd.s32 %s20, 1
      %s28 = ssub.s32 %s20, %s27
      %p29 = scmp.eq.s32.totalorder %s28, 0
      %s31 = sadd.s32 %s30, 1
      %s32 = scalar_select %p29, %s30, %s31
      %p35 = pneg %p29
      %p36 = scmp.eq.s32.totalorder %s20, 1
      %p37 = por %p35, %p36
      %p38 = scmp.ne.s32.totalorder %s30, %s33
      %p39 = scmp.eq.s32.totalorder %s20, 0
      %p40 = por %p38, %p39
      %p41 = scmp.ne.s32.totalorder %s30, %s33
      %p42 = scmp.eq.s32.totalorder %s25, 1
      %p43 = por %p41, %p42
      %p44 = scmp.ne.s32.totalorder %s33, %s34
      %p45 = scmp.eq.s32.totalorder %s25, 0
      %p46 = por %p44, %p45
      %p47 = scmp.ne.s32.totalorder %s33, %s34
      %p48 = scmp.eq.s32.totalorder %s26, 1
      %p49 = por %p47, %p48
      %p51 = scmp.ne.s32.totalorder %s34, %s50
      %p52 = scmp.eq.s32.totalorder %s26, 0
      %p53 = por %p51, %p52
      %s54 = ssub.s32 %s20, %s27
      %p55 = scmp.eq.s32.totalorder %s54, 0
      %s57 = sadd.s32 %s56, 1
      %s58 = scalar_select %p55, %s56, %s57
      %p61 = pneg %p55
      %p62 = scmp.eq.s32.totalorder %s20, 1
      %p63 = por %p61, %p62
      %p64 = scmp.ne.s32.totalorder %s56, %s59
      %p65 = scmp.eq.s32.totalorder %s20, 0
      %p66 = por %p64, %p65
      %p67 = scmp.ne.s32.totalorder %s56, %s59
      %p68 = scmp.eq.s32.totalorder %s25, 1
      %p69 = por %p67, %p68
      %p70 = scmp.ne.s32.totalorder %s59, %s60
      %p71 = scmp.eq.s32.totalorder %s25, 0
      %p72 = por %p70, %p71
      %p73 = scmp.ne.s32.totalorder %s59, %s60
      %p74 = scmp.eq.s32.totalorder %s26, 1
      %p75 = por %p73, %p74
      %p77 = scmp.ne.s32.totalorder %s60, %s76
      %p78 = scmp.eq.s32.totalorder %s26, 0
      %p79 = por %p77, %p78
      %s80 = ssub.s32 %s20, %s27
      %p81 = scmp.eq.s32.totalorder %s80, 0
      %s83 = sadd.s32 %s82, 1
      %s84 = scalar_select %p81, %s82, %s83
      %p87 = pneg %p81
      %p88 = scmp.eq.s32.totalorder %s20, 1
      %p89 = por %p87, %p88
      %p90 = scmp.ne.s32.totalorder %s82, %s85
      %p91 = scmp.eq.s32.totalorder %s20, 0
      %p92 = por %p90, %p91
      %p93 = scmp.ne.s32.totalorder %s82, %s85
      %p94 = scmp.eq.s32.totalorder %s25, 1
      %p95 = por %p93, %p94
      %p96 = scmp.ne.s32.totalorder %s85, %s86
      %p97 = scmp.eq.s32.totalorder %s25, 0
      %p98 = por %p96, %p97
      %p99 = scmp.ne.s32.totalorder %s85, %s86
      %p100 = scmp.eq.s32.totalorder %s26, 1
      %p101 = por %p99, %p100
      %p103 = scmp.ne.s32.totalorder %s86, %s102
      %p104 = scmp.eq.s32.totalorder %s26, 0
      %p105 = por %p103, %p104
      %s106 = ssub.s32 %s20, %s27
      %p107 = scmp.eq.s32.totalorder %s106, 0
      %s109 = sadd.s32 %s108, 1
      %s110 = scalar_select %p107, %s108, %s109
      %p113 = pneg %p107
      %p114 = scmp.eq.s32.totalorder %s20, 1
      %p115 = por %p113, %p114
      %p116 = scmp.ne.s32.totalorder %s108, %s111
      %p117 = scmp.eq.s32.totalorder %s20, 0
      %p118 = por %p116, %p117
      %p119 = scmp.ne.s32.totalorder %s108, %s111
      %p120 = scmp.eq.s32.totalorder %s25, 1
      %p121 = por %p119, %p120
      %p122 = scmp.ne.s32.totalorder %s111, %s112
      %p123 = scmp.eq.s32.totalorder %s25, 0
      %p124 = por %p122, %p123
      %p125 = scmp.ne.s32.totalorder %s111, %s112
      %p126 = scmp.eq.s32.totalorder %s26, 1
      %p127 = por %p125, %p126
      %p129 = scmp.ne.s32.totalorder %s112, %s128
      %p130 = scmp.eq.s32.totalorder %s26, 0
      %p131 = por %p129, %p130
      %s132 = ssub.s32 %s20, %s27
      %p133 = scmp.eq.s32.totalorder %s132, 0
      %s135 = sadd.s32 %s134, 1
      %s136 = scalar_select %p133, %s134, %s135
      %p139 = pneg %p133
      %p140 = scmp.eq.s32.totalorder %s20, 1
      %p141 = por %p139, %p140
      %p142 = scmp.ne.s32.totalorder %s134, %s137
      %p143 = scmp.eq.s32.totalorder %s20, 0
      %p144 = por %p142, %p143
      %p145 = scmp.ne.s32.totalorder %s134, %s137
      %p146 = scmp.eq.s32.totalorder %s25, 1
      %p147 = por %p145, %p146
      %p148 = scmp.ne.s32.totalorder %s137, %s138
      %p149 = scmp.eq.s32.totalorder %s25, 0
      %p150 = por %p148, %p149
      %p151 = scmp.ne.s32.totalorder %s137, %s138
      %p152 = scmp.eq.s32.totalorder %s26, 1
      %p153 = por %p151, %p152
      %p155 = scmp.ne.s32.totalorder %s138, %s154
      %p156 = scmp.eq.s32.totalorder %s26, 0
      %p157 = por %p155, %p156
      %s159 = sadd.s32 %s158, 1
      %p162 = scmp.eq.s32.totalorder %s20, 1
      %p163 = scmp.ne.s32.totalorder %s158, %s160
      %p164 = scmp.eq.s32.totalorder %s20, 0
      %p165 = por %p163, %p164
      %p166 = scmp.ne.s32.totalorder %s158, %s160
      %p167 = scmp.eq.s32.totalorder %s25, 1
      %p168 = por %p166, %p167
      %p169 = scmp.ne.s32.totalorder %s160, %s161
      %p170 = scmp.eq.s32.totalorder %s25, 0
      %p171 = por %p169, %p170
      %p172 = scmp.ne.s32.totalorder %s160, %s161
      %p173 = scmp.eq.s32.totalorder %s26, 1
      %p174 = por %p172, %p173
      %p176 = scmp.ne.s32.totalorder %s161, %s175
      %p177 = scmp.eq.s32.totalorder %s26, 0
      %p178 = por %p176, %p177
      %s180 = sadd.s32 %s179, 1
      %p183 = scmp.eq.s32.totalorder %s20, 1
      %p184 = scmp.ne.s32.totalorder %s179, %s181
      %p185 = scmp.eq.s32.totalorder %s20, 0
      %p186 = por %p184, %p185
      %p187 = scmp.ne.s32.totalorder %s179, %s181
      %p188 = scmp.eq.s32.totalorder %s25, 1
      %p189 = por %p187, %p188
      %p190 = scmp.ne.s32.totalorder %s181, %s182
      %p191 = scmp.eq.s32.totalorder %s25, 0
      %p192 = por %p190, %p191
      %p193 = scmp.ne.s32.totalorder %s181, %s182
      %p194 = scmp.eq.s32.totalorder %s26, 1
      %p195 = por %p193, %p194
      %p197 = scmp.ne.s32.totalorder %s182, %s196
      %p198 = scmp.eq.s32.totalorder %s26, 0
      %p199 = por %p197, %p198
      %s201 = sadd.s32 %s200, 1
      %p204 = scmp.eq.s32.totalorder %s20, 1
      %p205 = scmp.ne.s32.totalorder %s200, %s202
      %p206 = scmp.eq.s32.totalorder %s20, 0
      %p207 = por %p205, %p206
      %p208 = scmp.ne.s32.totalorder %s200, %s202
      %p209 = scmp.eq.s32.totalorder %s25, 1
      %p210 = por %p208, %p209
      %p211 = scmp.ne.s32.totalorder %s202, %s203
      %p212 = scmp.eq.s32.totalorder %s25, 0
      %p213 = por %p211, %p212
      %p214 = scmp.ne.s32.totalorder %s202, %s203
      %p215 = scmp.eq.s32.totalorder %s26, 1
      %p216 = por %p214, %p215
      %p218 = scmp.ne.s32.totalorder %s203, %s217
      %p219 = scmp.eq.s32.totalorder %s26, 0
      %p220 = por %p218, %p219
      %s222 = sadd.s32 %s221, 1
      %p225 = scmp.eq.s32.totalorder %s20, 1
      %p226 = scmp.ne.s32.totalorder %s221, %s223
      %p227 = scmp.eq.s32.totalorder %s20, 0
      %p228 = por %p226, %p227
      %p229 = scmp.ne.s32.totalorder %s221, %s223
      %p230 = scmp.eq.s32.totalorder %s25, 1
      %p231 = por %p229, %p230
      %p232 = scmp.ne.s32.totalorder %s223, %s224
      %p233 = scmp.eq.s32.totalorder %s25, 0
      %p234 = por %p232, %p233
      %p235 = scmp.ne.s32.totalorder %s223, %s224
      %p236 = scmp.eq.s32.totalorder %s26, 1
      %p237 = por %p235, %p236
      %p239 = scmp.ne.s32.totalorder %s224, %s238
      %p240 = scmp.eq.s32.totalorder %s26, 0
      %p241 = por %p239, %p240
      %s243 = sadd.s32 %s242, 1
      %p246 = scmp.eq.s32.totalorder %s20, 1
      %p247 = scmp.ne.s32.totalorder %s242, %s244
      %p248 = scmp.eq.s32.totalorder %s20, 0
      %p249 = por %p247, %p248
      %p250 = scmp.ne.s32.totalorder %s242, %s244
      %p251 = scmp.eq.s32.totalorder %s25, 1
      %p252 = por %p250, %p251
      %p253 = scmp.ne.s32.totalorder %s244, %s245
      %p254 = scmp.eq.s32.totalorder %s25, 0
      %p255 = por %p253, %p254
      %p256 = scmp.ne.s32.totalorder %s244, %s245
      %p257 = scmp.eq.s32.totalorder %s26, 1
      %p258 = por %p256, %p257
      %p260 = scmp.ne.s32.totalorder %s245, %s259
      %p261 = scmp.eq.s32.totalorder %s26, 0
      %p262 = por %p260, %p261
      %s263 = ssub.s32 %s20, %s27
      %p264 = scmp.eq.s32.totalorder %s263, 0
      %s266 = sadd.s32 %s265, 1
      %s267 = scalar_select %p264, %s265, %s266
      %p270 = pneg %p264
      %p271 = scmp.eq.s32.totalorder %s20, 1
      %p272 = por %p270, %p271
      %p273 = scmp.ne.s32.totalorder %s265, %s268
      %p274 = scmp.eq.s32.totalorder %s20, 0
      %p275 = por %p273, %p274
      %p276 = scmp.ne.s32.totalorder %s265, %s268
      %p277 = scmp.eq.s32.totalorder %s25, 1
      %p278 = por %p276, %p277
      %p279 = scmp.ne.s32.totalorder %s268, %s269
      %p280 = scmp.eq.s32.totalorder %s25, 0
      %p281 = por %p279, %p280
      %p282 = scmp.ne.s32.totalorder %s268, %s269
      %p283 = scmp.eq.s32.totalorder %s26, 1
      %p284 = por %p282, %p283
      %p286 = scmp.ne.s32.totalorder %s269, %s285
      %p287 = scmp.eq.s32.totalorder %s26, 0
      %p288 = por %p286, %p287
      %p289 = scmp.le.s32.totalorder 1, %s20
      %p290 = scmp.lt.s32.totalorder %s20, 3
      %p291 = pnand %p289, %p290
      %p292 = pneg %p291
      // Predicated region
      $region9: #{tpu_custom_call.1} parent=5 // pred_check
        _
      $region10: #{tpu_custom_call.1} parent=5 // pred_check_branch
        %294 = sbr.rel (%p291) target = $region12
      $region11: #{tpu_custom_call.1} parent=5 // pred_region
        %s295 = ssub.s32 %s20, 1
        // Predicated region
        $region13: #{tpu_custom_call.1} parent=11 // pred_check
          %p296 = pneg %p171
        $region14: #{tpu_custom_call.1} parent=11 // pred_check_branch
          %298 = sbr.rel (%p296) target = $region16
        $region15: #{tpu_custom_call.1} parent=11 // pred_region
          %s300 = ssub.s32 1280, 1280
          %301 = vsyncadd [#allocation5], %s300
          %s302 = sshll.u32 [#allocation4], 4
          %s303 = int_to_ptr.vmem [resolvable:$true] %s302
          %308 = dma.hbm_to_vmem [thread:$0]  %s5, 1280, %s303, [#allocation5], 64, 64, 4
        $region16: #{tpu_custom_call.1} parent=11 // pred_fallthru
          _
        // Predicated region
        $region17: #{tpu_custom_call.1} parent=11 // pred_check
          %p309 = pneg %p192
        $region18: #{tpu_custom_call.1} parent=11 // pred_check_branch
          %311 = sbr.rel (%p309) target = $region20
        $region19: #{tpu_custom_call.1} parent=11 // pred_region
          _
        $region20: #{tpu_custom_call.1} parent=11 // pred_fallthru
          _
        // Predicated region
        $region21: #{tpu_custom_call.1} parent=11 // pred_check
          %p312 = pneg %p213
        $region22: #{tpu_custom_call.1} parent=11 // pred_check_branch
          %314 = sbr.rel (%p312) target = $region24
        $region23: #{tpu_custom_call.1} parent=11 // pred_region
          _
        $region24: #{tpu_custom_call.1} parent=11 // pred_fallthru
          _
        // Predicated region
        $region25: #{tpu_custom_call.1} parent=11 // pred_check
          %p315 = pneg %p234
        $region26: #{tpu_custom_call.1} parent=11 // pred_check_branch
          %317 = sbr.rel (%p315) target = $region28
        $region27: #{tpu_custom_call.1} parent=11 // pred_region
          _
        $region28: #{tpu_custom_call.1} parent=11 // pred_fallthru
          _
        // Predicated region
        $region29: #{tpu_custom_call.1} parent=11 // pred_check
          %p318 = pneg %p255
        $region30: #{tpu_custom_call.1} parent=11 // pred_check_branch
          %320 = sbr.rel (%p318) target = $region32
        $region31: #{tpu_custom_call.1} parent=11 // pred_region
          _
        $region32: #{tpu_custom_call.1} parent=11 // pred_fallthru
          _
      $region12: #{tpu_custom_call.1} parent=5 // pred_fallthru
        _
      %p321 = scmp.lt.s32.totalorder %s20, 2
      // Predicated region
      $region33: #{tpu_custom_call.1} parent=5 // pred_check
        %p322 = pneg %p321
      $region34: #{tpu_custom_call.1} parent=5 // pred_check_branch
        %324 = sbr.rel (%p322) target = $region36
      $region35: #{tpu_custom_call.1} parent=5 // pred_region
        // Predicated region
        $region37: #{tpu_custom_call.1} parent=35 // pred_check
          %p325 = pneg %p40
        $region38: #{tpu_custom_call.1} parent=35 // pred_check_branch
          %327 = sbr.rel (%p325) target = $region40
        $region39: #{tpu_custom_call.1} parent=35 // pred_region
          %p328 = scmp.lt.s32.totalorder %s20, 1
          %s329 = scalar_select %p328, %s20, 1
          %s330 = smul.addr %s329, 4
          %s331 = scalar_lea.vmem %s0, %s330
        $region40: #{tpu_custom_call.1} parent=35 // pred_fallthru
          _
        // Predicated region
        $region41: #{tpu_custom_call.1} parent=35 // pred_check
          %p332 = pneg %p66
        $region42: #{tpu_custom_call.1} parent=35 // pred_check_branch
          %334 = sbr.rel (%p332) target = $region44
        $region43: #{tpu_custom_call.1} parent=35 // pred_region
          %p335 = scmp.lt.s32.totalorder %s20, 1
          %s336 = scalar_select %p335, %s20, 1
          %s337 = smul.addr %s336, 4
          %s338 = scalar_lea.vmem %s1, %s337
        $region44: #{tpu_custom_call.1} parent=35 // pred_fallthru
          _
        // Predicated region
        $region45: #{tpu_custom_call.1} parent=35 // pred_check
          %p339 = pneg %p92
        $region46: #{tpu_custom_call.1} parent=35 // pred_check_branch
          %341 = sbr.rel (%p339) target = $region48
        $region47: #{tpu_custom_call.1} parent=35 // pred_region
          %p342 = scmp.lt.s32.totalorder %s20, 1
          %s343 = scalar_select %p342, %s20, 1
          %s344 = smul.addr %s343, 4
          %s345 = scalar_lea.vmem %s2, %s344
        $region48: #{tpu_custom_call.1} parent=35 // pred_fallthru
          _
        // Predicated region
        $region49: #{tpu_custom_call.1} parent=35 // pred_check
          %p346 = pneg %p118
        $region50: #{tpu_custom_call.1} parent=35 // pred_check_branch
          %348 = sbr.rel (%p346) target = $region52
        $region51: #{tpu_custom_call.1} parent=35 // pred_region
          %s349 = sand.u32 %s108, 1
          %s350 = scalar_lea.sflag [#allocation3], %s349
          %s351 = sand.u32 %s108, 1
          %s352 = smul.addr %s351, 4
          %s353 = scalar_lea.vmem [#allocation2], %s352
          %s355 = ssub.s32 64, 64
          %356 = vsyncadd %s350, %s355
          %s357 = smul.addr %s20, 64
          %s358 = scalar_lea.hbm %s3, %s357
          %s360 = sshll.u32 %s353, 4
          %s361 = int_to_ptr.vmem [resolvable:$true] %s360
          %363 = dma.hbm_to_vmem [thread:$0]  %s358, 64, %s361, %s350
        $region52: #{tpu_custom_call.1} parent=35 // pred_fallthru
          _
        // Predicated region
        $region53: #{tpu_custom_call.1} parent=35 // pred_check
          %p364 = pneg %p144
        $region54: #{tpu_custom_call.1} parent=35 // pred_check_branch
          %366 = sbr.rel (%p364) target = $region56
        $region55: #{tpu_custom_call.1} parent=35 // pred_region
          %p367 = scmp.lt.s32.totalorder %s20, 1
          %s368 = scalar_select %p367, %s20, 1
          %s369 = smul.addr %s368, 4
          %s370 = scalar_lea.vmem %s4, %s369
        $region56: #{tpu_custom_call.1} parent=35 // pred_fallthru
          _
      $region36: #{tpu_custom_call.1} parent=5 // pred_fallthru
        _
      %p371 = scmp.le.s32.totalorder 1, %s20
      %p372 = scmp.lt.s32.totalorder %s20, 3
      %p373 = pnand %p371, %p372
      %p374 = pneg %p373
      // Predicated region
      $region57: #{tpu_custom_call.1} parent=5 // pred_check
        _
      $region58: #{tpu_custom_call.1} parent=5 // pred_check_branch
        %376 = sbr.rel (%p373) target = $region60
      $region59: #{tpu_custom_call.1} parent=5 // pred_region
        %s377 = ssub.s32 %s20, 1
        %s378 = sand.u32 %s111, 1
        %s379 = scalar_lea.sflag [#allocation3], %s378
        %s380 = sand.u32 %s111, 1
        %s381 = smul.addr %s380, 4
        %s382 = scalar_lea.vmem [#allocation2], %s381
        // Predicated region
        $region61: #{tpu_custom_call.1} parent=59 // pred_check
          %p383 = pneg %p124
        $region62: #{tpu_custom_call.1} parent=59 // pred_check_branch
          %385 = sbr.rel (%p383) target = $region64
        $region63: #{tpu_custom_call.1} parent=59 // pred_region
          %386 = dma.done %s379, 64
        $region64: #{tpu_custom_call.1} parent=59 // pred_fallthru
          _
        // Predicated region
        $region65: #{tpu_custom_call.1} parent=59 // pred_check
          %p387 = pneg %p171
        $region66: #{tpu_custom_call.1} parent=59 // pred_check_branch
          %389 = sbr.rel (%p387) target = $region68
        $region67: #{tpu_custom_call.1} parent=59 // pred_region
          %390 = dma.done [#allocation5], 1280
        $region68: #{tpu_custom_call.1} parent=59 // pred_fallthru
          _
        %p391 = scmp.lt.s32.totalorder %s25, 1
        %s392 = scalar_select %p391, %s25, 1
        %s393 = smul.addr %s392, 4
        %s394 = scalar_lea.vmem %s0, %s393
        %p395 = pneg %p46
        %p396 = pneg %p43
        %p397 = scmp.lt.s32.totalorder %s25, 1
        %s398 = scalar_select %p397, %s25, 1
        %s399 = smul.addr %s398, 4
        %s400 = scalar_lea.vmem %s1, %s399
        %p401 = pneg %p72
        %p402 = pneg %p69
        %p403 = scmp.lt.s32.totalorder %s25, 1
        %s404 = scalar_select %p403, %s25, 1
        %s405 = smul.addr %s404, 4
        %s406 = scalar_lea.vmem %s2, %s405
        %p407 = pneg %p98
        %p408 = pneg %p95
        %s409 = sand.u32 %s111, 1
        %s410 = scalar_lea.sflag [#allocation3], %s409
        %s411 = sand.u32 %s111, 1
        %s412 = smul.addr %s411, 4
        %s413 = scalar_lea.vmem [#allocation2], %s412
        %p414 = pneg %p124
        %p415 = pneg %p121
        %p416 = scmp.lt.s32.totalorder %s25, 1
        %s417 = scalar_select %p416, %s25, 1
        %s418 = smul.addr %s417, 4
        %s419 = scalar_lea.vmem %s4, %s418
        %p420 = pneg %p150
        %p421 = pneg %p147
        %p422 = pneg %p171
        %p423 = pneg %p168
        %p424 = pneg %p192
        %p425 = pneg %p189
        %p426 = pneg %p213
        %p427 = pneg %p210
        %p428 = pneg %p234
        %p429 = pneg %p231
        %p430 = pneg %p255
        %p431 = pneg %p252
        %p432 = pneg %p281
        %p433 = pneg %p278
        %p434 = scmp.lt.s32.totalorder %s25, 1
        %s435 = scalar_select %p434, %s25, 1
        %s436 = smul.addr %s435, 8
        %s437 = scalar_lea.vmem %s10, %s436
        %p438 = scmp.lt.s32.totalorder %s25, 1
        %s439 = scalar_select %p438, %s25, 1
        %s440 = smul.addr %s439, 4
        %s441 = scalar_lea.vmem %s0, %s440
        %p442 = scmp.lt.s32.totalorder %s25, 1
        %s443 = scalar_select %p442, %s25, 1
        %s444 = smul.addr %s443, 4
        %s445 = scalar_lea.vmem %s1, %s444
        %p446 = scmp.lt.s32.totalorder %s25, 1
        %s447 = scalar_select %p446, %s25, 1
        %s448 = smul.addr %s447, 4
        %s449 = scalar_lea.vmem %s2, %s448
        %p450 = scmp.lt.s32.totalorder %s25, 1
        %s451 = scalar_select %p450, %s25, 1
        %s452 = smul.addr %s451, 4
        %s453 = scalar_lea.vmem %s4, %s452
        %p454 = scmp.lt.s32.totalorder %s25, 1
        %s455 = scalar_select %p454, %s25, 1
        %s456 = smul.addr %s455, 8
        %s457 = scalar_lea.vmem %s10, %s456
        %v459 = vld [vmem:[%s441] sm:$0xf]
        %v460 = vld [vmem:[#allocation4] sm:$0xf]
        %v461 = vld [vmem:[#allocation4 + $0x4] sm:$0xf]
        %v462 = vld [vmem:[#allocation4 + $0x8] sm:$0xf]
        %v463 = vld [vmem:[#allocation4 + $0xc] sm:$0xf]
        %v464 = vld [vmem:[%s6] sm:$0x1]
        %v466 = vlaneseq
        %v467 = vshrl.u32 %v466, 7
        %v468 = vsub.s32 0, %v467
        %v469 = vrot.slane %v464, %v468
        %v475 = vunpack.c.l.b16 %v460
        %v476 = vunpack.c.l.b16 %v461
        %v477 = vunpack.c.l.b16 %v462
        %v478 = vunpack.c.l.b16 %v463
        %v479 = vpack.c.b16 %v476, %v475
        %v480 = vpack.c.b16 %v478, %v477
        %vm483 = vcmask 261120
        %v485 = vsel %vm483, %v459, 0
        %487 = vmatprep.subr.bf16.mxu0 0
        %488 = vmatpush1.bf16.msra.mxu0 %v479
        %489 = vmatprep.subr.bf16.mxu0 0
        %490 = vmatpush1.bf16.msra.mxu0 %v480
        %491 = vmatprep.subr.bf16.mxu0 0
        %492 = vmatpush1.bf16.msra.mxu0 0
        %493 = vmatprep.subr.bf16.mxu0 0
        %494 = vmatpush1.bf16.msra.mxu0 0
        %495 = vmatprep.subr.bf16.mxu0 0
        %496 = vmatpush1.bf16.msra.mxu0 0
        %497 = vmatprep.subr.bf16.mxu0 0
        %498 = vmatpush1.bf16.msra.mxu0 0
        %499 = vmatprep.subr.bf16.mxu0 0
        %500 = vmatpush1.bf16.msra.mxu0 0
        %501 = vmatprep.subr.bf16.mxu0 0
        %502 = vmatpush1.bf16.msra.mxu0 0
        %503 = vmatprep.subr.bf16.mxu0 0
        %504 = vmatpush1.bf16.msra.mxu0 0
        %505 = vmatprep.subr.bf16.mxu0 0
        %506 = vmatpush1.bf16.msra.mxu0 0
        %507 = vmatprep.subr.bf16.mxu0 0
        %508 = vmatpush1.bf16.msra.mxu0 0
        %509 = vmatprep.subr.bf16.mxu0 0
        %510 = vmatpush1.bf16.msra.mxu0 0
        %511 = vmatprep.subr.bf16.mxu0 0
        %512 = vmatpush1.bf16.msra.mxu0 0
        %513 = vmatprep.subr.bf16.mxu0 0
        %514 = vmatpush1.bf16.msra.mxu0 0
        %515 = vmatprep.subr.bf16.mxu0 0
        %516 = vmatpush1.bf16.msra.mxu0 0
        %517 = vmatprep.subr.bf16.mxu0 0
        %518 = vmatpush1.bf16.msra.mxu0 0
        %519 = vmatprep.mubr.bf16.mxu0 0
        %520 = vmatmul.mubr.bf16.gmra.mrb[0].mxu0 %v485
        %v521 = vpop.f32.mrb[0].mxu0
        %v522 = vadd.f32 %v469, %v521
        %v523 = vpop.f32.mrb[0].mxu0
        %v524 = vpop.f32.mrb[0].mxu0
        %v525 = vpop.f32.mrb[0].mxu0
        %526 = vdwg.mxu0
        %v527 = vmax.f32 %v522, 0.0
        %v528 = vld [vmem:[%s7] sm:$0x1]
        %v530 = vlaneseq
        %v531 = vshrl.u32 %v530, 7
        %v532 = vsub.s32 0, %v531
        %v533 = vrot.slane %v528, %v532
        %v535 = vmul.f32 %v527, %v533
        %v536 = vsel %vm483, %v535, 0.0
        %537 = vadd.xlane.f32.xlu0 %v536
        %v538 = vpop.xlane.xlu0 %537
        %v539 = vld [vmem:[%s445] sm:$0xf]
        %s540 = scalar_lea.vmem [#allocation4], 16
        %v541 = vld [vmem:[%s540] sm:$0xf]
        %v542 = vld [vmem:[%s540 + $0x4] sm:$0xf]
        %v543 = vld [vmem:[%s540 + $0x8] sm:$0xf]
        %v544 = vld [vmem:[%s540 + $0xc] sm:$0xf]
        %s545 = scalar_lea.vmem %s6, 1
        %v546 = vld [vmem:[%s545] sm:$0x1]
        %v548 = vlaneseq
        %v549 = vshrl.u32 %v548, 7
        %v550 = vsub.s32 0, %v549
        %v551 = vrot.slane %v546, %v550
        %v557 = vunpack.c.l.b16 %v541
        %v558 = vunpack.c.l.b16 %v542
        %v559 = vunpack.c.l.b16 %v543
        %v560 = vunpack.c.l.b16 %v544
        %v561 = vpack.c.b16 %v558, %v557
        %v562 = vpack.c.b16 %v560, %v559
        %v566 = vsel %vm483, %v539, 0
        %568 = vmatprep.subr.bf16.mxu0 0
        %569 = vmatpush1.bf16.msra.mxu0 %v561
        %570 = vmatprep.subr.bf16.mxu0 0
        %571 = vmatpush1.bf16.msra.mxu0 %v562
        %572 = vmatprep.subr.bf16.mxu0 0
        %573 = vmatpush1.bf16.msra.mxu0 0
        %574 = vmatprep.subr.bf16.mxu0 0
        %575 = vmatpush1.bf16.msra.mxu0 0
        %576 = vmatprep.subr.bf16.mxu0 0
        %577 = vmatpush1.bf16.msra.mxu0 0
        %578 = vmatprep.subr.bf16.mxu0 0
        %579 = vmatpush1.bf16.msra.mxu0 0
        %580 = vmatprep.subr.bf16.mxu0 0
        %581 = vmatpush1.bf16.msra.mxu0 0
        %582 = vmatprep.subr.bf16.mxu0 0
        %583 = vmatpush1.bf16.msra.mxu0 0
        %584 = vmatprep.subr.bf16.mxu0 0
        %585 = vmatpush1.bf16.msra.mxu0 0
        %586 = vmatprep.subr.bf16.mxu0 0
        %587 = vmatpush1.bf16.msra.mxu0 0
        %588 = vmatprep.subr.bf16.mxu0 0
        %589 = vmatpush1.bf16.msra.mxu0 0
        %590 = vmatprep.subr.bf16.mxu0 0
        %591 = vmatpush1.bf16.msra.mxu0 0
        %592 = vmatprep.subr.bf16.mxu0 0
        %593 = vmatpush1.bf16.msra.mxu0 0
        %594 = vmatprep.subr.bf16.mxu0 0
        %595 = vmatpush1.bf16.msra.mxu0 0
        %596 = vmatprep.subr.bf16.mxu0 0
        %597 = vmatpush1.bf16.msra.mxu0 0
        %598 = vmatprep.subr.bf16.mxu0 0
        %599 = vmatpush1.bf16.msra.mxu0 0
        %600 = vmatprep.mubr.bf16.mxu0 0
        %601 = vmatmul.mubr.bf16.gmra.mrb[0].mxu0 %v566
        %v602 = vpop.f32.mrb[0].mxu0
        %v603 = vadd.f32 %v551, %v602
        %v604 = vpop.f32.mrb[0].mxu0
        %v605 = vpop.f32.mrb[0].mxu0
        %v606 = vpop.f32.mrb[0].mxu0
        %607 = vdwg.mxu0
        %v608 = vmax.f32 %v603, 0.0
        %s609 = scalar_lea.vmem %s7, 1
        %v610 = vld [vmem:[%s609] sm:$0x1]
        %v612 = vlaneseq
        %v613 = vshrl.u32 %v612, 7
        %v614 = vsub.s32 0, %v613
        %v615 = vrot.slane %v610, %v614
        %v617 = vmul.f32 %v608, %v615
        %v618 = vsel %vm483, %v617, 0.0
        %619 = vadd.xlane.f32.xlu0 %v618
        %v620 = vpop.xlane.xlu0 %619
        %v621 = vmax.f32 %v538, %v620
        %v622 = vsub.f32 %v538, %v621
        %v623 = vmul.f32 %v622, 1.442695
        %v624 = vpow.pop %v623
        %v625 = vsub.f32 %v620, %v621
        %v626 = vmul.f32 %v625, 1.442695
        %v627 = vpow.pop %v626
        %v628 = vadd.f32 %v624, %v627
        %v629 = vmul.f32 %v527, %v624
        %v630 = vmul.f32 %v608, %v627
        %v631 = vadd.f32 %v629, %v630
        %v632 = vld [vmem:[%s449] sm:$0xf]
        %s633 = scalar_lea.vmem [#allocation4], 32
        %v634 = vld [vmem:[%s633] sm:$0xf]
        %v635 = vld [vmem:[%s633 + $0x4] sm:$0xf]
        %v636 = vld [vmem:[%s633 + $0x8] sm:$0xf]
        %v637 = vld [vmem:[%s633 + $0xc] sm:$0xf]
        %s638 = scalar_lea.vmem %s6, 2
        %v639 = vld [vmem:[%s638] sm:$0x1]
        %v641 = vlaneseq
        %v642 = vshrl.u32 %v641, 7
        %v643 = vsub.s32 0, %v642
        %v644 = vrot.slane %v639, %v643
        %v650 = vunpack.c.l.b16 %v634
        %v651 = vunpack.c.l.b16 %v635
        %v652 = vunpack.c.l.b16 %v636
        %v653 = vunpack.c.l.b16 %v637
        %v654 = vpack.c.b16 %v651, %v650
        %v655 = vpack.c.b16 %v653, %v652
        %v659 = vsel %vm483, %v632, 0
        %661 = vmatprep.subr.bf16.mxu0 0
        %662 = vmatpush1.bf16.msra.mxu0 %v654
        %663 = vmatprep.subr.bf16.mxu0 0
        %664 = vmatpush1.bf16.msra.mxu0 %v655
        %665 = vmatprep.subr.bf16.mxu0 0
        %666 = vmatpush1.bf16.msra.mxu0 0
        %667 = vmatprep.subr.bf16.mxu0 0
        %668 = vmatpush1.bf16.msra.mxu0 0
        %669 = vmatprep.subr.bf16.mxu0 0
        %670 = vmatpush1.bf16.msra.mxu0 0
        %671 = vmatprep.subr.bf16.mxu0 0
        %672 = vmatpush1.bf16.msra.mxu0 0
        %673 = vmatprep.subr.bf16.mxu0 0
        %674 = vmatpush1.bf16.msra.mxu0 0
        %675 = vmatprep.subr.bf16.mxu0 0
        %676 = vmatpush1.bf16.msra.mxu0 0
        %677 = vmatprep.subr.bf16.mxu0 0
        %678 = vmatpush1.bf16.msra.mxu0 0
        %679 = vmatprep.subr.bf16.mxu0 0
        %680 = vmatpush1.bf16.msra.mxu0 0
        %681 = vmatprep.subr.bf16.mxu0 0
        %682 = vmatpush1.bf16.msra.mxu0 0
        %683 = vmatprep.subr.bf16.mxu0 0
        %684 = vmatpush1.bf16.msra.mxu0 0
        %685 = vmatprep.subr.bf16.mxu0 0
        %686 = vmatpush1.bf16.msra.mxu0 0
        %687 = vmatprep.subr.bf16.mxu0 0
        %688 = vmatpush1.bf16.msra.mxu0 0
        %689 = vmatprep.subr.bf16.mxu0 0
        %690 = vmatpush1.bf16.msra.mxu0 0
        %691 = vmatprep.subr.bf16.mxu0 0
        %692 = vmatpush1.bf16.msra.mxu0 0
        %693 = vmatprep.mubr.bf16.mxu0 0
        %694 = vmatmul.mubr.bf16.gmra.mrb[0].mxu0 %v659
        %v695 = vpop.f32.mrb[0].mxu0
        %v696 = vadd.f32 %v644, %v695
        %v697 = vpop.f32.mrb[0].mxu0
        %v698 = vpop.f32.mrb[0].mxu0
        %v699 = vpop.f32.mrb[0].mxu0
        %700 = vdwg.mxu0
        %v701 = vmax.f32 %v696, 0.0
        %s702 = scalar_lea.vmem %s7, 2
        %v703 = vld [vmem:[%s702] sm:$0x1]
        %v705 = vlaneseq
        %v706 = vshrl.u32 %v705, 7
        %v707 = vsub.s32 0, %v706
        %v708 = vrot.slane %v703, %v707
        %v710 = vmul.f32 %v701, %v708
        %v711 = vsel %vm483, %v710, 0.0
        %712 = vadd.xlane.f32.xlu0 %v711
        %v713 = vpop.xlane.xlu0 %712
        %v714 = vmax.f32 %v621, %v713
        %v715 = vsub.f32 %v621, %v714
        %v716 = vmul.f32 %v715, 1.442695
        %v717 = vpow.pop %v716
        %v718 = vsub.f32 %v713, %v714
        %v719 = vmul.f32 %v718, 1.442695
        %v720 = vpow.pop %v719
        %v721 = vmul.f32 %v628, %v717
        %v722 = vadd.f32 %v721, %v720
        %v723 = vmul.f32 %v631, %v717
        %v724 = vmul.f32 %v701, %v720
        %v725 = vadd.f32 %v723, %v724
        %v726 = vld [vmem:[%s382] sm:$0xf]
        %s727 = scalar_lea.vmem [#allocation4], 48
        %v728 = vld [vmem:[%s727] sm:$0xf]
        %v729 = vld [vmem:[%s727 + $0x4] sm:$0xf]
        %v730 = vld [vmem:[%s727 + $0x8] sm:$0xf]
        %v731 = vld [vmem:[%s727 + $0xc] sm:$0xf]
        %s732 = scalar_lea.vmem %s6, 3
        %v733 = vld [vmem:[%s732] sm:$0x1]
        %v735 = vlaneseq
        %v736 = vshrl.u32 %v735, 7
        %v737 = vsub.s32 0, %v736
        %v738 = vrot.slane %v733, %v737
        %v744 = vunpack.c.l.b16 %v728
        %v745 = vunpack.c.l.b16 %v729
        %v746 = vunpack.c.l.b16 %v730
        %v747 = vunpack.c.l.b16 %v731
        %v748 = vpack.c.b16 %v745, %v744
        %v749 = vpack.c.b16 %v747, %v746
        %v753 = vsel %vm483, %v726, 0
        %755 = vmatprep.subr.bf16.mxu0 0
        %756 = vmatpush1.bf16.msra.mxu0 %v748
        %757 = vmatprep.subr.bf16.mxu0 0
        %758 = vmatpush1.bf16.msra.mxu0 %v749
        %759 = vmatprep.subr.bf16.mxu0 0
        %760 = vmatpush1.bf16.msra.mxu0 0
        %761 = vmatprep.subr.bf16.mxu0 0
        %762 = vmatpush1.bf16.msra.mxu0 0
        %763 = vmatprep.subr.bf16.mxu0 0
        %764 = vmatpush1.bf16.msra.mxu0 0
        %765 = vmatprep.subr.bf16.mxu0 0
        %766 = vmatpush1.bf16.msra.mxu0 0
        %767 = vmatprep.subr.bf16.mxu0 0
        %768 = vmatpush1.bf16.msra.mxu0 0
        %769 = vmatprep.subr.bf16.mxu0 0
        %770 = vmatpush1.bf16.msra.mxu0 0
        %771 = vmatprep.subr.bf16.mxu0 0
        %772 = vmatpush1.bf16.msra.mxu0 0
        %773 = vmatprep.subr.bf16.mxu0 0
        %774 = vmatpush1.bf16.msra.mxu0 0
        %775 = vmatprep.subr.bf16.mxu0 0
        %776 = vmatpush1.bf16.msra.mxu0 0
        %777 = vmatprep.subr.bf16.mxu0 0
        %778 = vmatpush1.bf16.msra.mxu0 0
        %779 = vmatprep.subr.bf16.mxu0 0
        %780 = vmatpush1.bf16.msra.mxu0 0
        %781 = vmatprep.subr.bf16.mxu0 0
        %782 = vmatpush1.bf16.msra.mxu0 0
        %783 = vmatprep.subr.bf16.mxu0 0
        %784 = vmatpush1.bf16.msra.mxu0 0
        %785 = vmatprep.subr.bf16.mxu0 0
        %786 = vmatpush1.bf16.msra.mxu0 0
        %787 = vmatprep.mubr.bf16.mxu0 0
        %788 = vmatmul.mubr.bf16.gmra.mrb[0].mxu0 %v753
        %v789 = vpop.f32.mrb[0].mxu0
        %v790 = vadd.f32 %v738, %v789
        %v791 = vpop.f32.mrb[0].mxu0
        %v792 = vpop.f32.mrb[0].mxu0
        %v793 = vpop.f32.mrb[0].mxu0
        %794 = vdwg.mxu0
        %v795 = vmax.f32 %v790, 0.0
        %s796 = scalar_lea.vmem %s7, 3
        %v797 = vld [vmem:[%s796] sm:$0x1]
        %v799 = vlaneseq
        %v800 = vshrl.u32 %v799, 7
        %v801 = vsub.s32 0, %v800
        %v802 = vrot.slane %v797, %v801
        %v804 = vmul.f32 %v795, %v802
        %v805 = vsel %vm483, %v804, 0.0
        %806 = vadd.xlane.f32.xlu0 %v805
        %v807 = vpop.xlane.xlu0 %806
        %v808 = vmax.f32 %v714, %v807
        %v809 = vsub.f32 %v714, %v808
        %v810 = vmul.f32 %v809, 1.442695
        %v811 = vpow.pop %v810
        %v812 = vsub.f32 %v807, %v808
        %v813 = vmul.f32 %v812, 1.442695
        %v814 = vpow.pop %v813
        %v815 = vmul.f32 %v722, %v811
        %v816 = vadd.f32 %v815, %v814
        %v817 = vmul.f32 %v725, %v811
        %v818 = vmul.f32 %v795, %v814
        %v819 = vadd.f32 %v817, %v818
        %v820 = vld [vmem:[%s453] sm:$0xf]
        %s821 = scalar_lea.vmem [#allocation4], 64
        %v822 = vld [vmem:[%s821] sm:$0xf]
        %v823 = vld [vmem:[%s821 + $0x4] sm:$0xf]
        %v824 = vld [vmem:[%s821 + $0x8] sm:$0xf]
        %v825 = vld [vmem:[%s821 + $0xc] sm:$0xf]
        %s826 = scalar_lea.vmem %s6, 4
        %v827 = vld [vmem:[%s826] sm:$0x1]
        %v829 = vlaneseq
        %v830 = vshrl.u32 %v829, 7
        %v831 = vsub.s32 0, %v830
        %v832 = vrot.slane %v827, %v831
        %v838 = vunpack.c.l.b16 %v822
        %v839 = vunpack.c.l.b16 %v823
        %v840 = vunpack.c.l.b16 %v824
        %v841 = vunpack.c.l.b16 %v825
        %v842 = vpack.c.b16 %v839, %v838
        %v843 = vpack.c.b16 %v841, %v840
        %v847 = vsel %vm483, %v820, 0
        %849 = vmatprep.subr.bf16.mxu0 0
        %850 = vmatpush1.bf16.msra.mxu0 %v842
        %851 = vmatprep.subr.bf16.mxu0 0
        %852 = vmatpush1.bf16.msra.mxu0 %v843
        %853 = vmatprep.subr.bf16.mxu0 0
        %854 = vmatpush1.bf16.msra.mxu0 0
        %855 = vmatprep.subr.bf16.mxu0 0
        %856 = vmatpush1.bf16.msra.mxu0 0
        %857 = vmatprep.subr.bf16.mxu0 0
        %858 = vmatpush1.bf16.msra.mxu0 0
        %859 = vmatprep.subr.bf16.mxu0 0
        %860 = vmatpush1.bf16.msra.mxu0 0
        %861 = vmatprep.subr.bf16.mxu0 0
        %862 = vmatpush1.bf16.msra.mxu0 0
        %863 = vmatprep.subr.bf16.mxu0 0
        %864 = vmatpush1.bf16.msra.mxu0 0
        %865 = vmatprep.subr.bf16.mxu0 0
        %866 = vmatpush1.bf16.msra.mxu0 0
        %867 = vmatprep.subr.bf16.mxu0 0
        %868 = vmatpush1.bf16.msra.mxu0 0
        %869 = vmatprep.subr.bf16.mxu0 0
        %870 = vmatpush1.bf16.msra.mxu0 0
        %871 = vmatprep.subr.bf16.mxu0 0
        %872 = vmatpush1.bf16.msra.mxu0 0
        %873 = vmatprep.subr.bf16.mxu0 0
        %874 = vmatpush1.bf16.msra.mxu0 0
        %875 = vmatprep.subr.bf16.mxu0 0
        %876 = vmatpush1.bf16.msra.mxu0 0
        %877 = vmatprep.subr.bf16.mxu0 0
        %878 = vmatpush1.bf16.msra.mxu0 0
        %879 = vmatprep.subr.bf16.mxu0 0
        %880 = vmatpush1.bf16.msra.mxu0 0
        %881 = vmatprep.mubr.bf16.mxu0 0
        %882 = vmatmul.mubr.bf16.gmra.mrb[0].mxu0 %v847
        %v883 = vpop.f32.mrb[0].mxu0
        %v884 = vadd.f32 %v832, %v883
        %v885 = vpop.f32.mrb[0].mxu0
        %v886 = vpop.f32.mrb[0].mxu0
        %v887 = vpop.f32.mrb[0].mxu0
        %888 = vdwg.mxu0
        %v889 = vmax.f32 %v884, 0.0
        %s890 = scalar_lea.vmem %s7, 4
        %v891 = vld [vmem:[%s890] sm:$0x1]
        %v893 = vlaneseq
        %v894 = vshrl.u32 %v893, 7
        %v895 = vsub.s32 0, %v894
        %v896 = vrot.slane %v891, %v895
        %v898 = vmul.f32 %v889, %v896
        %v899 = vsel %vm483, %v898, 0.0
        %900 = vadd.xlane.f32.xlu0 %v899
        %v901 = vpop.xlane.xlu0 %900
        %v902 = vmax.f32 %v808, %v901
        %v903 = vsub.f32 %v808, %v902
        %v904 = vmul.f32 %v903, 1.442695
        %v905 = vpow.pop %v904
        %v906 = vsub.f32 %v901, %v902
        %v907 = vmul.f32 %v906, 1.442695
        %v908 = vpow.pop %v907
        %v909 = vmul.f32 %v816, %v905
        %v910 = vadd.f32 %v909, %v908
        %v911 = vmul.f32 %v819, %v905
        %v912 = vmul.f32 %v889, %v908
        %v913 = vadd.f32 %v911, %v912
        %v914 = vrcp.pop %v910
        %v915 = vmul.f32 %v913, %v914
        %v916 = vmax.f32 %v915, 0.0
        %v917 = vpack.c.bf16 %v916, %v916
        %v918 = vld [vmem:[%s8] sm:$0xf]
        %v919 = vld [vmem:[%s8 + $0x4] sm:$0xf]
        %v920 = vld [vmem:[%s8 + $0x8] sm:$0xf]
        %v921 = vld [vmem:[%s8 + $0xc] sm:$0xf]
        %v922 = vld [vmem:[%s9] sm:$0x1]
        %v924 = vlaneseq
        %v925 = vshrl.u32 %v924, 7
        %v926 = vsub.s32 0, %v925
        %v927 = vrot.slane %v922, %v926
        %v933 = vunpack.c.l.b16 %v918
        %v934 = vunpack.c.l.b16 %v919
        %v935 = vunpack.c.l.b16 %v920
        %v936 = vunpack.c.l.b16 %v921
        %v937 = vpack.c.b16 %v934, %v933
        %v938 = vpack.c.b16 %v936, %v935
        %v942 = vsel %vm483, %v917, 0
        %944 = vmatprep.subr.bf16.mxu0 0
        %945 = vmatpush1.bf16.msra.mxu0 %v937
        %946 = vmatprep.subr.bf16.mxu0 0
        %947 = vmatpush1.bf16.msra.mxu0 %v938
        %948 = vmatprep.subr.bf16.mxu0 0
        %949 = vmatpush1.bf16.msra.mxu0 0
        %950 = vmatprep.subr.bf16.mxu0 0
        %951 = vmatpush1.bf16.msra.mxu0 0
        %952 = vmatprep.subr.bf16.mxu0 0
        %953 = vmatpush1.bf16.msra.mxu0 0
        %954 = vmatprep.subr.bf16.mxu0 0
        %955 = vmatpush1.bf16.msra.mxu0 0
        %956 = vmatprep.subr.bf16.mxu0 0
        %957 = vmatpush1.bf16.msra.mxu0 0
        %958 = vmatprep.subr.bf16.mxu0 0
        %959 = vmatpush1.bf16.msra.mxu0 0
        %960 = vmatprep.subr.bf16.mxu0 0
        %961 = vmatpush1.bf16.msra.mxu0 0
        %962 = vmatprep.subr.bf16.mxu0 0
        %963 = vmatpush1.bf16.msra.mxu0 0
        %964 = vmatprep.subr.bf16.mxu0 0
        %965 = vmatpush1.bf16.msra.mxu0 0
        %966 = vmatprep.subr.bf16.mxu0 0
        %967 = vmatpush1.bf16.msra.mxu0 0
        %968 = vmatprep.subr.bf16.mxu0 0
        %969 = vmatpush1.bf16.msra.mxu0 0
        %970 = vmatprep.subr.bf16.mxu0 0
        %971 = vmatpush1.bf16.msra.mxu0 0
        %972 = vmatprep.subr.bf16.mxu0 0
        %973 = vmatpush1.bf16.msra.mxu0 0
        %974 = vmatprep.subr.bf16.mxu0 0
        %975 = vmatpush1.bf16.msra.mxu0 0
        %976 = vmatprep.mubr.bf16.mxu0 0
        %977 = vmatmul.mubr.bf16.gmra.mrb[0].mxu0 %v942
        %v978 = vpop.f32.mrb[0].mxu0
        %v979 = vadd.f32 %v927, %v978
        %v980 = vpop.f32.mrb[0].mxu0
        %v981 = vpop.f32.mrb[0].mxu0
        %v982 = vpop.f32.mrb[0].mxu0
        %983 = vdwg.mxu0
        %vm984 = vcmask 64512
        %985 = vst.msk [vmem:[%s457] sm:$0xff] %vm984, %v979
        %p986 = scmp.lt.s32.totalorder %s25, 1
        %s987 = scalar_select %p986, %s25, 1
        %s988 = smul.addr %s987, 8
        %s989 = scalar_lea.vmem %s10, %s988
        // Predicated region
        $region69: #{tpu_custom_call.1} parent=59 // pred_check
          %p990 = pneg %p278
        $region70: #{tpu_custom_call.1} parent=59 // pred_check_branch
          %992 = sbr.rel (%p990) target = $region72
        $region71: #{tpu_custom_call.1} parent=59 // pred_region
          _
        $region72: #{tpu_custom_call.1} parent=59 // pred_fallthru
          _
      $region60: #{tpu_custom_call.1} parent=5 // pred_fallthru
        _
      %p993 = scmp.le.s32.totalorder 2, %s20
      // Predicated region
      $region73: #{tpu_custom_call.1} parent=5 // pred_check
        %p994 = pneg %p993
      $region74: #{tpu_custom_call.1} parent=5 // pred_check_branch
        %996 = sbr.rel (%p994) target = $region76
      $region75: #{tpu_custom_call.1} parent=5 // pred_region
        %s997 = ssub.s32 %s20, 2
        // Predicated region
        $region77: #{tpu_custom_call.1} parent=75 // pred_check
          %p998 = pneg %p284
        $region78: #{tpu_custom_call.1} parent=75 // pred_check_branch
          %1000 = sbr.rel (%p998) target = $region80
        $region79: #{tpu_custom_call.1} parent=75 // pred_region
          %p1001 = scmp.lt.s32.totalorder %s26, 1
          %s1002 = scalar_select %p1001, %s26, 1
          %s1003 = smul.addr %s1002, 8
          %s1004 = scalar_lea.vmem %s10, %s1003
        $region80: #{tpu_custom_call.1} parent=75 // pred_fallthru
          _
      $region76: #{tpu_custom_call.1} parent=5 // pred_fallthru
        _
    $region6: #{tpu_custom_call.1} parent=1 // loop_footer
      %s24 = sadd.s32 1, %s20
    $region7: #{tpu_custom_call.1} parent=1 // loop_footer_branch
      %19 = sbr.rel target = $region3
    $region8: #{tpu_custom_call.1} parent=1 // loop_exit
      _
    %1005 = vsyncpa [#allocation3], 1
    %s1006 = scalar_lea.sflag [#allocation3], 1
    %1007 = vsyncpa %s1006, 1
    %1008 = vsyncpa [#allocation5], 1

</llo_original>
